<compile_context>
chip_gen: v6e
topology: v6e:2x2x1
jax: 0.10.0
libtpu: 0.0.40
codegen_flags: <defaults>
</compile_context>

<pallas_src>
import jax
import jax.numpy as jnp
from jax import lax
from jax.experimental import pallas as pl
from jax.experimental.pallas import tpu as pltpu


_LANE = 128          # batch-tile granularity (output lanes per block)
_TB_TARGET = 8192    # ~512 KiB of f32 x per grid step at input_size=16


def _round_up(n, m):
    return -(-n // m) * m


def attack_kernel(x_ref, w1_ref, b1_ref, w2_ref, b2_ref, o_ref):
    # x_ref : (TB, IN) VMEM (pipelined)     w1_ref: (IN, H) VMEM (resident)
    # b1_ref: (1, H)   VMEM (resident)      w2_ref: (1, H)  VMEM (resident)
    # b2_ref: (1,)     SMEM scalar          o_ref : (1, TB) VMEM (lane-dense)
    # fc1 + ReLU: MXU matmul with f32 accumulation, bias/ReLU on the VPU.
    h = jnp.dot(x_ref[...], w1_ref[...], preferred_element_type=jnp.float32)
    h = jnp.maximum(h + b1_ref[...], 0.0)                      # (TB, H)
    # fc2 as w2 @ h^T: contract the minor dims of both operands (native MXU
    # A @ B.T form).  Result is lane-major: one sample per lane -> (1, TB).
    z = lax.dot_general(
        w2_ref[...], h,
        dimension_numbers=(((1,), (1,)), ((), ())),
        preferred_element_type=jnp.float32,
    ) + b2_ref[0]
    # Sigmoid on the EUP; lane-dense store, contiguous writeback DMA.
    o_ref[...] = jax.nn.sigmoid(z).astype(o_ref.dtype)


def _choose_tb(batch, requested):
    """Pick a batch tile: big enough to amortize the fixed per-step pipeline
    overhead, capped so the grid has >= 2 steps (both v7x TensorCores busy)
    whenever the batch allows it."""
    b_ceil = _round_up(max(int(batch), 1), _LANE)
    tb = _TB_TARGET if requested is None else int(requested)
    tb = _round_up(max(tb, _LANE), _LANE)
    tb = min(tb, b_ceil)
    if b_ceil >= 2 * _LANE:
        tb = min(tb, max(_LANE, (b_ceil // 2) // _LANE * _LANE))
    return tb


def attack_net_forward(x, w1, b1, w2, b2, *, tb=None):
    """sigmoid(fc2(relu(fc1(x)))), matching AttackNet_MembershipInference.

    x : (B, input_size) float32
    w1: (input_size, hidden)  == torch fc1.weight.T
    b1: (hidden,) or (1, hidden)
    w2: (1, hidden)           == torch fc2.weight
    b2: (1,) or scalar
    Returns (B, 1) float32.
    """
    x = jnp.asarray(x, jnp.float32)
    B, IN = x.shape
    H = w1.shape[1]

    w1 = jnp.asarray(w1, jnp.float32).reshape(IN, H)
    b1 = jnp.asarray(b1, jnp.float32).reshape(1, H)
    w2 = jnp.asarray(w2, jnp.float32).reshape(1, H)
    b2 = jnp.asarray(b2, jnp.float32).reshape(1)

    tb = _choose_tb(B, tb)
    grid_b = pl.cdiv(B, tb)
    b_pad = grid_b * tb
    if b_pad != B:
        # Ragged batch: pad with zero rows (sliced off below).  Padded rows
        # just compute sigmoid(bias terms), which is finite and discarded.
        x = jnp.pad(x, ((0, b_pad - B), (0, 0)))

    def _run(x_pipeline_mode):
        if x_pipeline_mode is not None:
            x_spec = pl.BlockSpec((tb, IN), lambda i: (i, 0),
                                  pipeline_mode=x_pipeline_mode)
        else:
            x_spec = pl.BlockSpec((tb, IN), lambda i: (i, 0))
        return pl.pallas_call(
            attack_kernel,
            out_shape=jax.ShapeDtypeStruct((1, b_pad), jnp.float32),
            grid_spec=pltpu.PrefetchScalarGridSpec(
                num_scalar_prefetch=0,
                grid=(grid_b,),
                in_specs=[
                    x_spec,                                             # x (pipelined)
                    pl.BlockSpec((IN, H), lambda i: (0, 0)),            # w1 (resident)
                    pl.BlockSpec((1, H), lambda i: (0, 0)),             # b1 (resident)
                    pl.BlockSpec((1, H), lambda i: (0, 0)),             # w2 (resident)
                    pl.BlockSpec(memory_space=pltpu.MemorySpace.SMEM),  # b2 scalar
                ],
                out_specs=pl.BlockSpec((1, tb), lambda i: (0, i)),      # lane-dense
            ),
            compiler_params=pltpu.CompilerParams(
                dimension_semantics=("parallel",),       # batch tiles shard on v7x
                vmem_limit_bytes=32 * 1024 * 1024,       # covers v5e's 16 MiB default
            ),
        )(x, w1, b1, w2, b2)

    try:
        # Deeper input pipelining: 3 in-flight x buffers keep the DMA engine
        # busy across short, overhead-dominated steps.
        out = _run(pl.Buffered(3))
    except Exception:  # older Pallas without pipeline_mode / tight VMEM: 2 buffers
        out = _run(None)

    return out[0, :B].reshape(B, 1)


def init_params(key, input_size, hidden_size):
    """Deterministic init mimicking torch.nn.Linear (uniform +/- 1/sqrt(fan_in))."""
    k1, k2, k3, k4 = jax.random.split(key, 4)
    bound1 = 1.0 / jnp.sqrt(jnp.float32(input_size))
    bound2 = 1.0 / jnp.sqrt(jnp.float32(hidden_size))
    # w1 stored as (in, hidden) so the kernel does x @ w1; w2 kept in torch's
    # native (1, hidden) layout.
    w1 = jax.random.uniform(k1, (input_size, hidden_size), jnp.float32, -bound1, bound1)
    b1 = jax.random.uniform(k2, (1, hidden_size), jnp.float32, -bound1, bound1)
    w2 = jax.random.uniform(k3, (1, hidden_size), jnp.float32, -bound2, bound2)
    b2 = jax.random.uniform(k4, (1,), jnp.float32, -bound2, bound2)
    return w1, b1, w2, b2


def reference_forward(x, w1, b1, w2, b2):
    h = jnp.maximum(x @ w1 + b1, 0.0)
    return jax.nn.sigmoid(h @ w2.T + b2)


if __name__ == "__main__":
    input_size = 16    # posterior-vector length fed to the attack model
    hidden_size = 32

    key = jax.random.PRNGKey(0)
    kx1, kx2, kp = jax.random.split(key, 3)
    w1, b1, w2, b2 = init_params(kp, input_size, hidden_size)

    # Small ragged batch (exercises padding; 2 grid steps of tb=128).
    batch1 = 200
    x1 = jax.random.normal(kx1, (batch1, input_size), dtype=jnp.float32)
    out1 = jax.block_until_ready(attack_net_forward(x1, w1, b1, w2, b2))
    ref1 = reference_forward(x1, w1, b1, w2, b2)
    assert out1.shape == (batch1, 1)
    assert jnp.allclose(out1, ref1, atol=2e-5, rtol=1e-5), "mismatch vs reference (small batch)"

    # Larger ragged batch: multi-step grid (>= 2 steps so both v7x TCs work)
    # with the auto-chosen bigger tile.
    batch2 = 4500
    x2 = jax.random.normal(kx2, (batch2, input_size), dtype=jnp.float32)
    out2 = jax.block_until_ready(attack_net_forward(x2, w1, b1, w2, b2))
    ref2 = reference_forward(x2, w1, b1, w2, b2)
    assert out2.shape == (batch2, 1)
    assert jnp.allclose(out2, ref2, atol=2e-5, rtol=1e-5), "mismatch vs reference (large batch)"

    print("KERNEL_OK")
</pallas_src>

<mosaic_0001>
module attributes {stable_mosaic.version = 11 : i64} {
  func.func @attack_kernel(%arg0: i32, %arg1: memref<128x16xf32, #tpu.memory_space<vmem>>, %arg2: memref<16x32xf32, #tpu.memory_space<vmem>>, %arg3: memref<1x32xf32, #tpu.memory_space<vmem>>, %arg4: memref<1x32xf32, #tpu.memory_space<vmem>>, %arg5: memref<1xf32, #tpu.memory_space<smem>>, %arg6: memref<1x128xf32, #tpu.memory_space<vmem>>) attributes {dimension_semantics = [#tpu.dimension_semantics<parallel>], iteration_bounds = array<i64: 2>, scalar_prefetch = 0 : i64, scratch_operands = 0 : i64, tpu.core_type = #tpu.core_type<tc>, window_params = [{transform_indices = @transform_0, window_bounds = array<i64: 128, 16>}, {pipeline_mode = #tpu.pipeline_mode<synchronous>, transform_indices = @transform_1, window_bounds = array<i64: 16, 32>}, {pipeline_mode = #tpu.pipeline_mode<synchronous>, transform_indices = @transform_2, window_bounds = array<i64: 1, 32>}, {pipeline_mode = #tpu.pipeline_mode<synchronous>, transform_indices = @transform_3, window_bounds = array<i64: 1, 32>}, {transform_indices = @transform_4, window_bounds = array<i64: 1>}, {transform_indices = @transform_5, window_bounds = array<i64: 1, 128>}]} {
    %c0 = arith.constant 0 : index
    %c0_0 = arith.constant 0 : index
    %0 = vector.load %arg1[%c0, %c0_0] : memref<128x16xf32, #tpu.memory_space<vmem>>, vector<128x16xf32>
    %c0_1 = arith.constant 0 : index
    %c0_2 = arith.constant 0 : index
    %1 = vector.load %arg2[%c0_1, %c0_2] : memref<16x32xf32, #tpu.memory_space<vmem>>, vector<16x32xf32>
    %cst = arith.constant dense<0.000000e+00> : vector<128x32xf32>
    %2 = tpu.matmul %0, %1, %cst {dimension_numbers = #tpu.dot_dimension_numbers<[1], [0], [0], [1], [0, 0, 1, 1], [], []>} : vector<128x16xf32>, vector<16x32xf32>, vector<128x32xf32> -> vector<128x32xf32>
    %c0_3 = arith.constant 0 : index
    %c0_4 = arith.constant 0 : index
    %3 = vector.load %arg3[%c0_3, %c0_4] : memref<1x32xf32, #tpu.memory_space<vmem>>, vector<1x32xf32>
    %4 = vector.broadcast %3 : vector<1x32xf32> to vector<128x32xf32>
    %5 = arith.addf %2, %4 : vector<128x32xf32>
    %cst_5 = arith.constant 0.000000e+00 : f32
    %6 = vector.broadcast %cst_5 : f32 to vector<128x32xf32>
    %7 = arith.maximumf %5, %6 : vector<128x32xf32>
    %c0_6 = arith.constant 0 : index
    %c0_7 = arith.constant 0 : index
    %8 = vector.load %arg4[%c0_6, %c0_7] : memref<1x32xf32, #tpu.memory_space<vmem>>, vector<1x32xf32>
    %cst_8 = arith.constant dense<0.000000e+00> : vector<1x128xf32>
    %9 = tpu.matmul %8, %7, %cst_8 {dimension_numbers = #tpu.dot_dimension_numbers<[1], [1], [0], [0], [0, 0, 1, 0], [], []>} : vector<1x32xf32>, vector<128x32xf32>, vector<1x128xf32> -> vector<1x128xf32>
    %c0_9 = arith.constant 0 : index
    %10 = memref.load %arg5[%c0_9] : memref<1xf32, #tpu.memory_space<smem>>
    %11 = vector.broadcast %10 : f32 to vector<1x128xf32>
    %12 = arith.addf %9, %11 : vector<1x128xf32>
    %13 = arith.negf %12 : vector<1x128xf32>
    %14 = math.exp %13 : vector<1x128xf32>
    %cst_10 = arith.constant 1.000000e+00 : f32
    %15 = vector.broadcast %cst_10 : f32 to vector<1x128xf32>
    %16 = arith.addf %15, %14 : vector<1x128xf32>
    %17 = arith.divf %15, %16 : vector<1x128xf32>
    %c0_11 = arith.constant 0 : index
    %c0_12 = arith.constant 0 : index
    %18 = vector.load %arg6[%c0_11, %c0_12] : memref<1x128xf32, #tpu.memory_space<vmem>>, vector<1x128xf32>
    tpu.vector_store %arg6[%c0_11, %c0_12], %17 {strides = array<i32>} : memref<1x128xf32, #tpu.memory_space<vmem>>, vector<1x128xf32>,
    return
  }
  func.func @transform_0(%arg0: i32) -> (i32, i32) {
    %c0_i32 = arith.constant 0 : i32
    %c0_i32_0 = arith.constant 0 : i32
    return %arg0, %c0_i32 : i32, i32
  }
  func.func @transform_1(%arg0: i32) -> (i32, i32) {
    %c0_i32 = arith.constant 0 : i32
    %c0_i32_0 = arith.constant 0 : i32
    %c0_i32_1 = arith.constant 0 : i32
    return %c0_i32, %c0_i32_0 : i32, i32
  }
  func.func @transform_2(%arg0: i32) -> (i32, i32) {
    %c0_i32 = arith.constant 0 : i32
    %c0_i32_0 = arith.constant 0 : i32
    %c0_i32_1 = arith.constant 0 : i32
    return %c0_i32, %c0_i32_0 : i32, i32
  }
  func.func @transform_3(%arg0: i32) -> (i32, i32) {
    %c0_i32 = arith.constant 0 : i32
    %c0_i32_0 = arith.constant 0 : i32
    %c0_i32_1 = arith.constant 0 : i32
    return %c0_i32, %c0_i32_0 : i32, i32
  }
  func.func @transform_4(%arg0: i32) -> i32 {
    %c0_i32 = arith.constant 0 : i32
    %c0_i32_0 = arith.constant 0 : i32
    return %c0_i32 : i32
  }
  func.func @transform_5(%arg0: i32) -> (i32, i32) {
    %c0_i32 = arith.constant 0 : i32
    %c0_i32_0 = arith.constant 0 : i32
    return %c0_i32, %arg0 : i32, i32
  }
}

</mosaic_0001>

<llo_original>
// kernel: tpu_custom_call.1
$region0: #{tpu_custom_call.1}
  #allocation0 [shape = 'u32[]', space=smem, size = 0x4, offset = 0x4, fixed_abs, tag = 'smem constant byte address 0x4 - core index']
  #allocation1 [shape = 'u32[144,128]{1,0:T(1,128)}', space=vmem, size = 0x12000, scoped, tag = 'internal scratch']
  #allocation2 [shape = 'f32[1]{0:T(128)S(6)}', space=smem, size = 0x200, scoped, tag = 'scoped memory for tpu_custom_call.1']
  %s0 = inlined_call_operand.vmem [shape: f32[256,16], index: 0, kind: input, shape index: {}]
  %s1 = inlined_call_operand.vmem [shape: f32[16,32], index: 1, kind: input, shape index: {}]
  %s2 = inlined_call_operand.vmem [shape: f32[1,32], index: 2, kind: input, shape index: {}]
  %s3 = inlined_call_operand.vmem [shape: f32[1,32], index: 3, kind: input, shape index: {}]
  %s4 = inlined_call_operand.<no memory space> [shape: f32[1], index: 4, kind: input, shape index: {}]
  %s5 = inlined_call_operand.hbm [shape: f32[1,256], index: 5, kind: output, shape index: {}]
  %s6 = sld [smem:[#allocation0]]
  $region53: #{tpu_custom_call.1} parent=0
    _
  %s8 = ssub.s32 1, %s6
  %s9 = scalar_select 0, %s8, %s6
  %10 = sst [smem:[#allocation2]] %s4
  $region1: #{tpu_custom_call.1} parent=0
    #allocation3 [shape = 'u8[1024]{0}', space=vmem, size = 0x400, scoped, tag = 'output window, operand 0']
    #allocation4 [shape = 's32[2]{0}', space=sflag, size = 0x8, scoped, tag = 'scoped memory for tpu_custom_call.1']
    %11 = vsyncpa [#allocation4], 0
    %s12 = scalar_lea.sflag [#allocation4], 1
    %13 = vsyncpa %s12, 0
    loop: start=0, step=1, limit=4
    $region2: #{tpu_custom_call.1} parent=1 // loop_pre_header
      _
    $region3: #{tpu_custom_call.1} parent=1 // loop_header
      %s15 = sphi 0, %s19
      %p16 = scmp.ge.s32.totalorder %s15, 4
      %s25 = sphi 0, %s27
      %s28 = sphi 0, %s25
      %s29 = sphi 0, %s28
      %s45 = sphi 0, %s29
      %s49 = sphi 0, %s49
      %s51 = sphi 0, %s49
      %s52 = sphi 0, %s51
      %s66 = sphi 0, %s52
      %s70 = sphi 0, %s70
      %s72 = sphi 0, %s70
      %s73 = sphi 0, %s72
      %s87 = sphi 0, %s73
      %s91 = sphi 0, %s91
      %s93 = sphi 0, %s91
      %s94 = sphi 0, %s93
      %s108 = sphi 0, %s94
      %s112 = sphi 0, %s112
      %s114 = sphi 0, %s112
      %s115 = sphi 0, %s114
      %s129 = sphi 0, %s115
      %s135 = sphi 0, %s137
      %s138 = sphi 0, %s135
      %s139 = sphi 0, %s138
      %s155 = sphi 0, %s139
    $region4: #{tpu_custom_call.1} parent=1 // loop_header_branch
      %18 = sbr.rel (%p16) target = $region8
    $region5: #{tpu_custom_call.1} parent=1 // loop_body
      %s20 = ssub.s32 %s15, 1
      %s21 = ssub.s32 %s15, 2
      %s22 = sadd.s32 %s15, 1
      %s23 = ssub.s32 %s15, %s22
      %p24 = scmp.eq.s32.totalorder %s23, 0
      %s26 = sadd.s32 %s25, 1
      %s27 = scalar_select %p24, %s25, %s26
      %p30 = pneg %p24
      %p31 = scmp.eq.s32.totalorder %s15, 1
      %p32 = por %p30, %p31
      %p33 = scmp.ne.s32.totalorder %s25, %s28
      %p34 = scmp.eq.s32.totalorder %s15, 0
      %p35 = por %p33, %p34
      %p36 = scmp.ne.s32.totalorder %s25, %s28
      %p37 = scmp.eq.s32.totalorder %s20, 1
      %p38 = por %p36, %p37
      %p39 = scmp.ne.s32.totalorder %s28, %s29
      %p40 = scmp.eq.s32.totalorder %s20, 0
      %p41 = por %p39, %p40
      %p42 = scmp.ne.s32.totalorder %s28, %s29
      %p43 = scmp.eq.s32.totalorder %s21, 1
      %p44 = por %p42, %p43
      %p46 = scmp.ne.s32.totalorder %s29, %s45
      %p47 = scmp.eq.s32.totalorder %s21, 0
      %p48 = por %p46, %p47
      %s50 = sadd.s32 %s49, 1
      %p53 = scmp.eq.s32.totalorder %s15, 1
      %p54 = scmp.ne.s32.totalorder %s49, %s51
      %p55 = scmp.eq.s32.totalorder %s15, 0
      %p56 = por %p54, %p55
      %p57 = scmp.ne.s32.totalorder %s49, %s51
      %p58 = scmp.eq.s32.totalorder %s20, 1
      %p59 = por %p57, %p58
      %p60 = scmp.ne.s32.totalorder %s51, %s52
      %p61 = scmp.eq.s32.totalorder %s20, 0
      %p62 = por %p60, %p61
      %p63 = scmp.ne.s32.totalorder %s51, %s52
      %p64 = scmp.eq.s32.totalorder %s21, 1
      %p65 = por %p63, %p64
      %p67 = scmp.ne.s32.totalorder %s52, %s66
      %p68 = scmp.eq.s32.totalorder %s21, 0
      %p69 = por %p67, %p68
      %s71 = sadd.s32 %s70, 1
      %p74 = scmp.eq.s32.totalorder %s15, 1
      %p75 = scmp.ne.s32.totalorder %s70, %s72
      %p76 = scmp.eq.s32.totalorder %s15, 0
      %p77 = por %p75, %p76
      %p78 = scmp.ne.s32.totalorder %s70, %s72
      %p79 = scmp.eq.s32.totalorder %s20, 1
      %p80 = por %p78, %p79
      %p81 = scmp.ne.s32.totalorder %s72, %s73
      %p82 = scmp.eq.s32.totalorder %s20, 0
      %p83 = por %p81, %p82
      %p84 = scmp.ne.s32.totalorder %s72, %s73
      %p85 = scmp.eq.s32.totalorder %s21, 1
      %p86 = por %p84, %p85
      %p88 = scmp.ne.s32.totalorder %s73, %s87
      %p89 = scmp.eq.s32.totalorder %s21, 0
      %p90 = por %p88, %p89
      %s92 = sadd.s32 %s91, 1
      %p95 = scmp.eq.s32.totalorder %s15, 1
      %p96 = scmp.ne.s32.totalorder %s91, %s93
      %p97 = scmp.eq.s32.totalorder %s15, 0
      %p98 = por %p96, %p97
      %p99 = scmp.ne.s32.totalorder %s91, %s93
      %p100 = scmp.eq.s32.totalorder %s20, 1
      %p101 = por %p99, %p100
      %p102 = scmp.ne.s32.totalorder %s93, %s94
      %p103 = scmp.eq.s32.totalorder %s20, 0
      %p104 = por %p102, %p103
      %p105 = scmp.ne.s32.totalorder %s93, %s94
      %p106 = scmp.eq.s32.totalorder %s21, 1
      %p107 = por %p105, %p106
      %p109 = scmp.ne.s32.totalorder %s94, %s108
      %p110 = scmp.eq.s32.totalorder %s21, 0
      %p111 = por %p109, %p110
      %s113 = sadd.s32 %s112, 1
      %p116 = scmp.eq.s32.totalorder %s15, 1
      %p117 = scmp.ne.s32.totalorder %s112, %s114
      %p118 = scmp.eq.s32.totalorder %s15, 0
      %p119 = por %p117, %p118
      %p120 = scmp.ne.s32.totalorder %s112, %s114
      %p121 = scmp.eq.s32.totalorder %s20, 1
      %p122 = por %p120, %p121
      %p123 = scmp.ne.s32.totalorder %s114, %s115
      %p124 = scmp.eq.s32.totalorder %s20, 0
      %p125 = por %p123, %p124
      %p126 = scmp.ne.s32.totalorder %s114, %s115
      %p127 = scmp.eq.s32.totalorder %s21, 1
      %p128 = por %p126, %p127
      %p130 = scmp.ne.s32.totalorder %s115, %s129
      %p131 = scmp.eq.s32.totalorder %s21, 0
      %p132 = por %p130, %p131
      %s133 = ssub.s32 %s15, %s22
      %p134 = scmp.eq.s32.totalorder %s133, 0
      %s136 = sadd.s32 %s135, 1
      %s137 = scalar_select %p134, %s135, %s136
      %p140 = pneg %p134
      %p141 = scmp.eq.s32.totalorder %s15, 1
      %p142 = por %p140, %p141
      %p143 = scmp.ne.s32.totalorder %s135, %s138
      %p144 = scmp.eq.s32.totalorder %s15, 0
      %p145 = por %p143, %p144
      %p146 = scmp.ne.s32.totalorder %s135, %s138
      %p147 = scmp.eq.s32.totalorder %s20, 1
      %p148 = por %p146, %p147
      %p149 = scmp.ne.s32.totalorder %s138, %s139
      %p150 = scmp.eq.s32.totalorder %s20, 0
      %p151 = por %p149, %p150
      %p152 = scmp.ne.s32.totalorder %s138, %s139
      %p153 = scmp.eq.s32.totalorder %s21, 1
      %p154 = por %p152, %p153
      %p156 = scmp.ne.s32.totalorder %s139, %s155
      %p157 = scmp.eq.s32.totalorder %s21, 0
      %p158 = por %p156, %p157
      %p159 = scmp.le.s32.totalorder 1, %s15
      %p160 = scmp.lt.s32.totalorder %s15, 3
      %p161 = pnand %p159, %p160
      %p162 = pneg %p161
      // Predicated region
      $region9: #{tpu_custom_call.1} parent=5 // pred_check
        _
      $region10: #{tpu_custom_call.1} parent=5 // pred_check_branch
        %164 = sbr.rel (%p161) target = $region12
      $region11: #{tpu_custom_call.1} parent=5 // pred_region
        %s165 = ssub.s32 %s15, 1
        // Predicated region
        $region13: #{tpu_custom_call.1} parent=11 // pred_check
          %p166 = pneg %p62
        $region14: #{tpu_custom_call.1} parent=11 // pred_check_branch
          %168 = sbr.rel (%p166) target = $region16
        $region15: #{tpu_custom_call.1} parent=11 // pred_region
          _
        $region16: #{tpu_custom_call.1} parent=11 // pred_fallthru
          _
        // Predicated region
        $region17: #{tpu_custom_call.1} parent=11 // pred_check
          %p169 = pneg %p83
        $region18: #{tpu_custom_call.1} parent=11 // pred_check_branch
          %171 = sbr.rel (%p169) target = $region20
        $region19: #{tpu_custom_call.1} parent=11 // pred_region
          _
        $region20: #{tpu_custom_call.1} parent=11 // pred_fallthru
          _
        // Predicated region
        $region21: #{tpu_custom_call.1} parent=11 // pred_check
          %p172 = pneg %p104
        $region22: #{tpu_custom_call.1} parent=11 // pred_check_branch
          %174 = sbr.rel (%p172) target = $region24
        $region23: #{tpu_custom_call.1} parent=11 // pred_region
          _
        $region24: #{tpu_custom_call.1} parent=11 // pred_fallthru
          _
        // Predicated region
        $region25: #{tpu_custom_call.1} parent=11 // pred_check
          %p175 = pneg %p125
        $region26: #{tpu_custom_call.1} parent=11 // pred_check_branch
          %177 = sbr.rel (%p175) target = $region28
        $region27: #{tpu_custom_call.1} parent=11 // pred_region
          _
        $region28: #{tpu_custom_call.1} parent=11 // pred_fallthru
          _
      $region12: #{tpu_custom_call.1} parent=5 // pred_fallthru
        _
      %p178 = scmp.lt.s32.totalorder %s15, 2
      // Predicated region
      $region29: #{tpu_custom_call.1} parent=5 // pred_check
        %p179 = pneg %p178
      $region30: #{tpu_custom_call.1} parent=5 // pred_check_branch
        %181 = sbr.rel (%p179) target = $region32
      $region31: #{tpu_custom_call.1} parent=5 // pred_region
        // Predicated region
        $region33: #{tpu_custom_call.1} parent=31 // pred_check
          %p182 = pneg %p35
        $region34: #{tpu_custom_call.1} parent=31 // pred_check_branch
          %184 = sbr.rel (%p182) target = $region36
        $region35: #{tpu_custom_call.1} parent=31 // pred_region
          %s185 = smul.u32 16, %s15
          %p186 = scmp.lt.s32.totalorder %s185, 31
          %s187 = scalar_select %p186, %s185, 31
          %s188 = smul.addr %s187, 8
          %s189 = scalar_lea.vmem %s0, %s188
          %s190 = smul.u32 16, %s15
        $region36: #{tpu_custom_call.1} parent=31 // pred_fallthru
          _
      $region32: #{tpu_custom_call.1} parent=5 // pred_fallthru
        _
      %p191 = scmp.le.s32.totalorder 1, %s15
      %p192 = scmp.lt.s32.totalorder %s15, 3
      %p193 = pnand %p191, %p192
      %p194 = pneg %p193
      // Predicated region
      $region37: #{tpu_custom_call.1} parent=5 // pred_check
        _
      $region38: #{tpu_custom_call.1} parent=5 // pred_check_branch
        %196 = sbr.rel (%p193) target = $region40
      $region39: #{tpu_custom_call.1} parent=5 // pred_region
        %s197 = ssub.s32 %s15, 1
        %s198 = smul.u32 16, %s20
        %p199 = scmp.lt.s32.totalorder %s198, 31
        %s200 = scalar_select %p199, %s198, 31
        %s201 = smul.addr %s200, 8
        %s202 = scalar_lea.vmem %s0, %s201
        %p203 = pneg %p41
        %p204 = pneg %p38
        %p205 = pneg %p62
        %p206 = pneg %p59
        %p207 = pneg %p83
        %p208 = pneg %p80
        %p209 = pneg %p104
        %p210 = pneg %p101
        %p211 = pneg %p125
        %p212 = pneg %p122
        %p213 = pneg %p151
        %p214 = pneg %p148
        %s215 = sand.u32 %s138, 1
        %s216 = scalar_lea.sflag [#allocation4], %s215
        %s217 = sand.u32 %s138, 1
        %s218 = scalar_lea.vmem [#allocation3], %s217
        %s219 = smul.u32 16, %s20
        %p220 = scmp.lt.s32.totalorder %s219, 31
        %s221 = scalar_select %p220, %s219, 31
        %s222 = smul.addr %s221, 8
        %s223 = scalar_lea.vmem %s0, %s222
        %s224 = smul.u32 16, %s20
        %v225 = vld [vmem:[%s223] sm:$0xff]
        %v226 = vld [vmem:[%s223 + $0x8] sm:$0xff]
        %v227 = vld [vmem:[%s223 + $0x10] sm:$0xff]
        %v228 = vld [vmem:[%s223 + $0x18] sm:$0xff]
        %v229 = vld [vmem:[%s223 + $0x20] sm:$0xff]
        %v230 = vld [vmem:[%s223 + $0x28] sm:$0xff]
        %v231 = vld [vmem:[%s223 + $0x30] sm:$0xff]
        %v232 = vld [vmem:[%s223 + $0x38] sm:$0xff]
        %v233 = vld [vmem:[%s223 + $0x40] sm:$0xff]
        %v234 = vld [vmem:[%s223 + $0x48] sm:$0xff]
        %v235 = vld [vmem:[%s223 + $0x50] sm:$0xff]
        %v236 = vld [vmem:[%s223 + $0x58] sm:$0xff]
        %v237 = vld [vmem:[%s223 + $0x60] sm:$0xff]
        %v238 = vld [vmem:[%s223 + $0x68] sm:$0xff]
        %v239 = vld [vmem:[%s223 + $0x70] sm:$0xff]
        %v240 = vld [vmem:[%s223 + $0x78] sm:$0xff]
        %v241 = vld [vmem:[%s1] sm:$0xff]
        %v242 = vld [vmem:[%s1 + $0x8] sm:$0xff]
        %v243 = vld [vmem:[%s2] sm:$0x1]
        %v245 = vlaneseq
        %v246 = vshrl.u32 %v245, 7
        %v247 = vsub.s32 0, %v246
        %v248 = vrot.slane %v243, %v247
        %vm250 = vcmask 130048
        %v252 = vsel %vm250, %v225, 0
        %v255 = vsel %vm250, %v226, 0
        %v258 = vsel %vm250, %v227, 0
        %v261 = vsel %vm250, %v228, 0
        %v264 = vsel %vm250, %v229, 0
        %v267 = vsel %vm250, %v230, 0
        %v270 = vsel %vm250, %v231, 0
        %v273 = vsel %vm250, %v232, 0
        %v276 = vsel %vm250, %v233, 0
        %v279 = vsel %vm250, %v234, 0
        %v282 = vsel %vm250, %v235, 0
        %v285 = vsel %vm250, %v236, 0
        %v288 = vsel %vm250, %v237, 0
        %v291 = vsel %vm250, %v238, 0
        %v294 = vsel %vm250, %v239, 0
        %v297 = vsel %vm250, %v240, 0
        %299 = vmatprep.subr.mxu0 0.0
        %300 = vmatpush1.msra.mxu0 0.0
        %301 = vmatprep.subr.mxu0 0.0
        %302 = vmatpush1.msra.mxu0 0.0
        %303 = vmatprep.subr.mxu0 0.0
        %304 = vmatpush1.msra.mxu0 0.0
        %305 = vmatprep.subr.mxu0 0.0
        %306 = vmatpush1.msra.mxu0 0.0
        %307 = vmatprep.subr.mxu0 0.0
        %308 = vmatpush1.msra.mxu0 0.0
        %309 = vmatprep.subr.mxu0 0.0
        %310 = vmatpush1.msra.mxu0 0.0
        %311 = vmatprep.subr.mxu0 0.0
        %312 = vmatpush1.msra.mxu0 0.0
        %313 = vmatprep.subr.mxu0 0.0
        %314 = vmatpush1.msra.mxu0 0.0
        %315 = vmatprep.subr.mxu0 0.0
        %316 = vmatpush1.msra.mxu0 0.0
        %317 = vmatprep.subr.mxu0 0.0
        %318 = vmatpush1.msra.mxu0 0.0
        %319 = vmatprep.subr.mxu0 0.0
        %320 = vmatpush1.msra.mxu0 0.0
        %321 = vmatprep.subr.mxu0 0.0
        %322 = vmatpush1.msra.mxu0 0.0
        %323 = vmatprep.subr.mxu0 0.0
        %324 = vmatpush1.msra.mxu0 0.0
        %325 = vmatprep.subr.mxu0 0.0
        %326 = vmatpush1.msra.mxu0 0.0
        %327 = vmatprep.subr.mxu0 0.0
        %328 = vmatpush1.msra.mxu0 %v242
        %329 = vmatprep.subr.mxu0 0.0
        %330 = vmatpush1.msra.mxu0 %v241
        %331 = vmatprep.subr.mxu0 0.0
        %332 = vmatpush2.msra.mxu0 0.0
        %333 = vmatprep.subr.mxu0 0.0
        %334 = vmatpush2.msra.mxu0 0.0
        %335 = vmatprep.subr.mxu0 0.0
        %336 = vmatpush2.msra.mxu0 0.0
        %337 = vmatprep.subr.mxu0 0.0
        %338 = vmatpush2.msra.mxu0 0.0
        %339 = vmatprep.subr.mxu0 0.0
        %340 = vmatpush2.msra.mxu0 0.0
        %341 = vmatprep.subr.mxu0 0.0
        %342 = vmatpush2.msra.mxu0 0.0
        %343 = vmatprep.subr.mxu0 0.0
        %344 = vmatpush2.msra.mxu0 0.0
        %345 = vmatprep.subr.mxu0 0.0
        %346 = vmatpush2.msra.mxu0 0.0
        %347 = vmatprep.subr.mxu0 0.0
        %348 = vmatpush2.msra.mxu0 0.0
        %349 = vmatprep.subr.mxu0 0.0
        %350 = vmatpush2.msra.mxu0 0.0
        %351 = vmatprep.subr.mxu0 0.0
        %352 = vmatpush2.msra.mxu0 0.0
        %353 = vmatprep.subr.mxu0 0.0
        %354 = vmatpush2.msra.mxu0 0.0
        %355 = vmatprep.subr.mxu0 0.0
        %356 = vmatpush2.msra.mxu0 0.0
        %357 = vmatprep.subr.mxu0 0.0
        %358 = vmatpush2.msra.mxu0 0.0
        %359 = vmatprep.subr.mxu0 0.0
        %360 = vmatpush2.msra.mxu0 0.0
        %361 = vmatprep.subr.mxu0 0.0
        %362 = vmatpush2.msra.mxu0 0.0
        %363 = vmatprep.mubr.f32.mxu0 0.0
        %364 = vmatmul.mubr.f32.gmra.mxu0 %v252
        %v365 = vpop.f32.mrf.mxu0
        %v366 = vadd.f32 %v248, %v365
        %v367 = vpop.f32.mrf.mxu0
        %368 = vmatprep.mubr.f32.mxu0 0.0
        %369 = vmatmul.mubr.f32.gmra.mxu0 %v255
        %v370 = vpop.f32.mrf.mxu0
        %v371 = vadd.f32 %v248, %v370
        %v372 = vpop.f32.mrf.mxu0
        %373 = vmatprep.mubr.f32.mxu0 0.0
        %374 = vmatmul.mubr.f32.gmra.mxu0 %v258
        %v375 = vpop.f32.mrf.mxu0
        %v376 = vadd.f32 %v248, %v375
        %v377 = vpop.f32.mrf.mxu0
        %378 = vmatprep.mubr.f32.mxu0 0.0
        %379 = vmatmul.mubr.f32.gmra.mxu0 %v261
        %v380 = vpop.f32.mrf.mxu0
        %v381 = vadd.f32 %v248, %v380
        %v382 = vpop.f32.mrf.mxu0
        %383 = vmatprep.mubr.f32.mxu0 0.0
        %384 = vmatmul.mubr.f32.gmra.mxu0 %v264
        %v385 = vpop.f32.mrf.mxu0
        %v386 = vadd.f32 %v248, %v385
        %v387 = vpop.f32.mrf.mxu0
        %388 = vmatprep.mubr.f32.mxu0 0.0
        %389 = vmatmul.mubr.f32.gmra.mxu0 %v267
        %v390 = vpop.f32.mrf.mxu0
        %v391 = vadd.f32 %v248, %v390
        %v392 = vpop.f32.mrf.mxu0
        %393 = vmatprep.mubr.f32.mxu0 0.0
        %394 = vmatmul.mubr.f32.gmra.mxu0 %v270
        %v395 = vpop.f32.mrf.mxu0
        %v396 = vadd.f32 %v248, %v395
        %v397 = vpop.f32.mrf.mxu0
        %398 = vmatprep.mubr.f32.mxu0 0.0
        %399 = vmatmul.mubr.f32.gmra.mxu0 %v273
        %v400 = vpop.f32.mrf.mxu0
        %v401 = vadd.f32 %v248, %v400
        %v402 = vpop.f32.mrf.mxu0
        %403 = vmatprep.mubr.f32.mxu0 0.0
        %404 = vmatmul.mubr.f32.gmra.mxu0 %v276
        %v405 = vpop.f32.mrf.mxu0
        %v406 = vadd.f32 %v248, %v405
        %v407 = vpop.f32.mrf.mxu0
        %408 = vmatprep.mubr.f32.mxu0 0.0
        %409 = vmatmul.mubr.f32.gmra.mxu0 %v279
        %v410 = vpop.f32.mrf.mxu0
        %v411 = vadd.f32 %v248, %v410
        %v412 = vpop.f32.mrf.mxu0
        %413 = vmatprep.mubr.f32.mxu0 0.0
        %414 = vmatmul.mubr.f32.gmra.mxu0 %v282
        %v415 = vpop.f32.mrf.mxu0
        %v416 = vadd.f32 %v248, %v415
        %v417 = vpop.f32.mrf.mxu0
        %418 = vmatprep.mubr.f32.mxu0 0.0
        %419 = vmatmul.mubr.f32.gmra.mxu0 %v285
        %v420 = vpop.f32.mrf.mxu0
        %v421 = vadd.f32 %v248, %v420
        %v422 = vpop.f32.mrf.mxu0
        %423 = vmatprep.mubr.f32.mxu0 0.0
        %424 = vmatmul.mubr.f32.gmra.mxu0 %v288
        %v425 = vpop.f32.mrf.mxu0
        %v426 = vadd.f32 %v248, %v425
        %v427 = vpop.f32.mrf.mxu0
        %428 = vmatprep.mubr.f32.mxu0 0.0
        %429 = vmatmul.mubr.f32.gmra.mxu0 %v291
        %v430 = vpop.f32.mrf.mxu0
        %v431 = vadd.f32 %v248, %v430
        %v432 = vpop.f32.mrf.mxu0
        %433 = vmatprep.mubr.f32.mxu0 0.0
        %434 = vmatmul.mubr.f32.gmra.mxu0 %v294
        %v435 = vpop.f32.mrf.mxu0
        %v436 = vadd.f32 %v248, %v435
        %v437 = vpop.f32.mrf.mxu0
        %438 = vmatprep.mubr.f32.mxu0 0.0
        %439 = vmatmul.mubr.f32.gmra.mxu0 %v297
        %v440 = vpop.f32.mrf.mxu0
        %v441 = vadd.f32 %v248, %v440
        %v442 = vpop.f32.mrf.mxu0
        %443 = vdwg.mxu0
        %v444 = vmax.f32 %v366, 0.0
        %v445 = vmax.f32 %v371, 0.0
        %v446 = vmax.f32 %v376, 0.0
        %v447 = vmax.f32 %v381, 0.0
        %v448 = vmax.f32 %v386, 0.0
        %v449 = vmax.f32 %v391, 0.0
        %v450 = vmax.f32 %v396, 0.0
        %v451 = vmax.f32 %v401, 0.0
        %v452 = vmax.f32 %v406, 0.0
        %v453 = vmax.f32 %v411, 0.0
        %v454 = vmax.f32 %v416, 0.0
        %v455 = vmax.f32 %v421, 0.0
        %v456 = vmax.f32 %v426, 0.0
        %v457 = vmax.f32 %v431, 0.0
        %v458 = vmax.f32 %v436, 0.0
        %v459 = vmax.f32 %v441, 0.0
        %v460 = vld [vmem:[%s3] sm:$0x1]
        %s461 = sld [smem:[#allocation2]]
        %v462 = vstv %s461
        %vm463 = vcmask 261120
        %v465 = vsel %vm463, %v460, 0
        %v468 = vsel %vm463, %v444, 0
        %v471 = vsel %vm463, %v445, 0
        %v474 = vsel %vm463, %v446, 0
        %v477 = vsel %vm463, %v447, 0
        %v480 = vsel %vm463, %v448, 0
        %v483 = vsel %vm463, %v449, 0
        %v486 = vsel %vm463, %v450, 0
        %v489 = vsel %vm463, %v451, 0
        %v492 = vsel %vm463, %v452, 0
        %v495 = vsel %vm463, %v453, 0
        %v498 = vsel %vm463, %v454, 0
        %v501 = vsel %vm463, %v455, 0
        %v504 = vsel %vm463, %v456, 0
        %v507 = vsel %vm463, %v457, 0
        %v510 = vsel %vm463, %v458, 0
        %v513 = vsel %vm463, %v459, 0
        %515 = vmatprep.subr.mxu0 0.0
        %516 = vmatpush1.xpose.msra.mxu0 %v513
        %517 = vmatprep.subr.mxu0 0.0
        %518 = vmatpush1.xpose.msra.mxu0 %v510
        %519 = vmatprep.subr.mxu0 0.0
        %520 = vmatpush1.xpose.msra.mxu0 %v507
        %521 = vmatprep.subr.mxu0 0.0
        %522 = vmatpush1.xpose.msra.mxu0 %v504
        %523 = vmatprep.subr.mxu0 0.0
        %524 = vmatpush1.xpose.msra.mxu0 %v501
        %525 = vmatprep.subr.mxu0 0.0
        %526 = vmatpush1.xpose.msra.mxu0 %v498
        %527 = vmatprep.subr.mxu0 0.0
        %528 = vmatpush1.xpose.msra.mxu0 %v495
        %529 = vmatprep.subr.mxu0 0.0
        %530 = vmatpush1.xpose.msra.mxu0 %v492
        %531 = vmatprep.subr.mxu0 0.0
        %532 = vmatpush1.xpose.msra.mxu0 %v489
        %533 = vmatprep.subr.mxu0 0.0
        %534 = vmatpush1.xpose.msra.mxu0 %v486
        %535 = vmatprep.subr.mxu0 0.0
        %536 = vmatpush1.xpose.msra.mxu0 %v483
        %537 = vmatprep.subr.mxu0 0.0
        %538 = vmatpush1.xpose.msra.mxu0 %v480
        %539 = vmatprep.subr.mxu0 0.0
        %540 = vmatpush1.xpose.msra.mxu0 %v477
        %541 = vmatprep.subr.mxu0 0.0
        %542 = vmatpush1.xpose.msra.mxu0 %v474
        %543 = vmatprep.subr.mxu0 0.0
        %544 = vmatpush1.xpose.msra.mxu0 %v471
        %545 = vmatprep.subr.mxu0 0.0
        %546 = vmatpush1.xpose.msra.mxu0 %v468
        %547 = vmatprep.subr.mxu0 0.0
        %548 = vmatpush2.xpose.msra.mxu0 0.0
        %549 = vmatprep.subr.mxu0 0.0
        %550 = vmatpush2.xpose.msra.mxu0 0.0
        %551 = vmatprep.subr.mxu0 0.0
        %552 = vmatpush2.xpose.msra.mxu0 0.0
        %553 = vmatprep.subr.mxu0 0.0
        %554 = vmatpush2.xpose.msra.mxu0 0.0
        %555 = vmatprep.subr.mxu0 0.0
        %556 = vmatpush2.xpose.msra.mxu0 0.0
        %557 = vmatprep.subr.mxu0 0.0
        %558 = vmatpush2.xpose.msra.mxu0 0.0
        %559 = vmatprep.subr.mxu0 0.0
        %560 = vmatpush2.xpose.msra.mxu0 0.0
        %561 = vmatprep.subr.mxu0 0.0
        %562 = vmatpush2.xpose.msra.mxu0 0.0
        %563 = vmatprep.subr.mxu0 0.0
        %564 = vmatpush2.xpose.msra.mxu0 0.0
        %565 = vmatprep.subr.mxu0 0.0
        %566 = vmatpush2.xpose.msra.mxu0 0.0
        %567 = vmatprep.subr.mxu0 0.0
        %568 = vmatpush2.xpose.msra.mxu0 0.0
        %569 = vmatprep.subr.mxu0 0.0
        %570 = vmatpush2.xpose.msra.mxu0 0.0
        %571 = vmatprep.subr.mxu0 0.0
        %572 = vmatpush2.xpose.msra.mxu0 0.0
        %573 = vmatprep.subr.mxu0 0.0
        %574 = vmatpush2.xpose.msra.mxu0 0.0
        %575 = vmatprep.subr.mxu0 0.0
        %576 = vmatpush2.xpose.msra.mxu0 0.0
        %577 = vmatprep.subr.mxu0 0.0
        %578 = vmatpush2.xpose.msra.mxu0 0.0
        %579 = vmatprep.mubr.f32.mxu0 0.0
        %580 = vmatmul.mubr.f32.gmra.mxu0 %v465
        %v581 = vpop.f32.mrf.mxu0
        %v582 = vadd.f32 %v462, %v581
        %v583 = vpop.f32.mrf.mxu0
        %584 = vdwg.mxu0
        %v585 = vxor.u32 %v582, 2147483648
        %v586 = vmul.f32 %v585, 1.442695
        %v587 = vpow.pop %v586
        %v588 = vadd.f32 %v587, 1.0
        %v589 = vrcp.pop %v588
        %v590 = vmul.f32 1.0, %v589
        %591 = vst [vmem:[%s218] sm:$0x1] %v590
        %s592 = sand.u32 %s138, 1
        %s593 = scalar_lea.sflag [#allocation4], %s592
        %s594 = sand.u32 %s138, 1
        %s595 = scalar_lea.vmem [#allocation3], %s594
        // Predicated region
        $region41: #{tpu_custom_call.1} parent=39 // pred_check
          %p596 = pneg %p148
        $region42: #{tpu_custom_call.1} parent=39 // pred_check_branch
          %598 = sbr.rel (%p596) target = $region44
        $region43: #{tpu_custom_call.1} parent=39 // pred_region
          %s600 = ssub.s32 16, 16
          %601 = vsyncadd %s593, %s600
          %s602 = smul.addr %s20, 16
          %s603 = scalar_lea.hbm %s5, %s602
          %s605 = sshll.u32 %s595, 4
          %s606 = int_to_ptr.vmem [resolvable:$true] %s605
          %608 = dma.vmem_to_hbm [thread:$0]  %s606, 16, %s603, %s593
        $region44: #{tpu_custom_call.1} parent=39 // pred_fallthru
          _
      $region40: #{tpu_custom_call.1} parent=5 // pred_fallthru
        _
      %p609 = scmp.le.s32.totalorder 2, %s15
      // Predicated region
      $region45: #{tpu_custom_call.1} parent=5 // pred_check
        %p610 = pneg %p609
      $region46: #{tpu_custom_call.1} parent=5 // pred_check_branch
        %612 = sbr.rel (%p610) target = $region48
      $region47: #{tpu_custom_call.1} parent=5 // pred_region
        %s613 = ssub.s32 %s15, 2
        // Predicated region
        $region49: #{tpu_custom_call.1} parent=47 // pred_check
          %p614 = pneg %p154
        $region50: #{tpu_custom_call.1} parent=47 // pred_check_branch
          %616 = sbr.rel (%p614) target = $region52
        $region51: #{tpu_custom_call.1} parent=47 // pred_region
          %s617 = sand.u32 %s139, 1
          %s618 = scalar_lea.sflag [#allocation4], %s617
          %s619 = sand.u32 %s139, 1
          %s620 = scalar_lea.vmem [#allocation3], %s619
          %621 = dma.done %s618, 16
        $region52: #{tpu_custom_call.1} parent=47 // pred_fallthru
          _
      $region48: #{tpu_custom_call.1} parent=5 // pred_fallthru
        _
    $region6: #{tpu_custom_call.1} parent=1 // loop_footer
      %s19 = sadd.s32 1, %s15
    $region7: #{tpu_custom_call.1} parent=1 // loop_footer_branch
      %14 = sbr.rel target = $region3
    $region8: #{tpu_custom_call.1} parent=1 // loop_exit
      _
    %622 = vsyncpa [#allocation4], 1
    %s623 = scalar_lea.sflag [#allocation4], 1
    %624 = vsyncpa %s623, 1

</llo_original>
